<compile_context>
chip_gen: v7x
topology: tpu7x:2x2x1
jax: 0.10.0
libtpu: 0.0.40
codegen_flags: <defaults>
</compile_context>

<pallas_src>
import functools

import jax
import jax.numpy as jnp
from jax.experimental import pallas as pl
from jax.experimental.pallas import tpu as pltpu


def _conv_relu_kernel(x_ref, w_ref, b_ref, hw_ref, o_ref, col_ref, *,
                      H, W, KH, KW, Cin, Cout, ph_lo, pw_lo, block_b, mm_dtype):
    """Conv2d(stride=1, padding='same') + ReLU for a block of batch elements.

    x_ref  : (block_b, Cin, H*W)   f32  NCHW activations, spatial flattened
    w_ref  : (Cout, KH*KW*Cin)     mm_dtype, resident across grid steps
    b_ref  : (Cout, 1)             f32
    hw_ref : (2, H*W)              i32  per-lane (h, w) coords (halo masking)
    o_ref  : (block_b, Cout, H*W)  f32  lane-dense output block
    col_ref: VMEM scratch (KH*KW*Cin, H*W) f32 -- im2col buffer
    """
    HW = H * W

    w = w_ref[...]                                   # hoisted: stays resident
    bias = b_ref[...]                                # (Cout, 1), lane-broadcast

    # Per-lane (h, w) coordinates, precomputed in the wrapper (no in-kernel
    # integer div/mod) and hoisted out of all loops.
    h_idx = jnp.broadcast_to(hw_ref[0:1, :], (Cin, HW))
    w_idx = jnp.broadcast_to(hw_ref[1:2, :], (Cin, HW))

    # Static (flat shift, halo mask) description of each of the KH*KW taps.
    taps = []
    for kh in range(KH):
        dy = kh - ph_lo
        for kw in range(KW):
            dx = kw - pw_lo
            shift = dy * W + dx                      # row-major flat shift
            if dy == 0 and dx == 0:
                taps.append((0, None))
            else:
                valid = ((h_idx >= -dy) & (h_idx < H - dy) &
                         (w_idx >= -dx) & (w_idx < W - dx))
                taps.append((shift, valid))

    for b in range(block_b):                         # static unroll; block_b small
        x = x_ref[b]                                 # (Cin, HW), lane-dense
        # Build the (K, H*W) im2col in VMEM: per tap one lane rotate (XLU) +
        # one zero-halo select (VPU) + one sublane-slice store. No reshapes,
        # no padded copy of x.
        for t, (shift, valid) in enumerate(taps):
            row = x if shift == 0 else pltpu.roll(x, shift=(-shift) % HW, axis=1)
            if valid is not None:
                row = jnp.where(valid, row, 0.0)
            col_ref[t * Cin:(t + 1) * Cin, :] = row
        col = col_ref[...].astype(mm_dtype)          # (K, HW)
        # One fat GEMM: (Cout, K) x (K, HW) -> (Cout, HW); f32 accumulation,
        # lane dim of the result is H*W (multiple of 128) -> unmasked stores.
        acc = jnp.dot(w, col, preferred_element_type=jnp.float32)
        acc = jnp.maximum(acc + bias, 0.0)           # bias + ReLU epilogue in f32
        o_ref[b] = acc.astype(o_ref.dtype)


def _pick_block_b(B):
    """Batch elements per grid step.

    Prefer >= 2 grid steps so both v7x TensorCores get work from the 'parallel'
    batch axis, while folding several batch elements per step for larger B to
    amortize the ~0.35us per-grid-step overhead.
    """
    for cand in (8, 4, 2):
        if B % cand == 0 and B // cand >= 2:
            return cand
    return 1 if B >= 2 else B


def signal_conv2d(x_nchw, weight, bias, *, block_b=None, use_bf16=True):
    """SignalConv2D forward: Conv2d(stride=1, padding='same') followed by ReLU.

    x_nchw : (B, Cin, H, W)       float32
    weight : (Cout, Cin, KH, KW)  (PyTorch Conv2d layout)
    bias   : (Cout,)
    returns: (B, Cout, H, W)      float32
    """
    B, Cin, H, W = x_nchw.shape
    Cout, Cin_w, KH, KW = weight.shape
    assert Cin_w == Cin
    HW = H * W
    K = KH * KW * Cin
    ph_lo = (KH - 1) // 2        # 'same' split for stride 1 (matches torch / XLA SAME)
    pw_lo = (KW - 1) // 2

    if block_b is None:
        block_b = _pick_block_b(B)
    assert B % block_b == 0
    grid_b = B // block_b

    mm_dtype = jnp.bfloat16 if use_bf16 else jnp.float32

    # Free metadata reshape (trailing dims contiguous): no HBM transpose/pad pass.
    x_flat = x_nchw.reshape(B, Cin, HW)

    # Weight repack (tiny, one-time): (Cout, Cin, KH, KW) -> (Cout, KH*KW*Cin),
    # K ordered (kh, kw, cin) to match the kernel's im2col row order.
    w2d = jnp.transpose(weight, (0, 2, 3, 1)).reshape(Cout, K).astype(mm_dtype)
    b2d = bias.reshape(Cout, 1).astype(jnp.float32)

    # Per-lane (h, w) coordinates for halo masking, computed once outside the
    # kernel (avoids in-kernel vector integer div/mod).
    n = jnp.arange(HW, dtype=jnp.int32)
    hw_idx = jnp.stack([n // W, n % W]).astype(jnp.int32)        # (2, HW)

    kernel = functools.partial(
        _conv_relu_kernel, H=H, W=W, KH=KH, KW=KW, Cin=Cin, Cout=Cout,
        ph_lo=ph_lo, pw_lo=pw_lo, block_b=block_b, mm_dtype=mm_dtype)

    out_flat = pl.pallas_call(
        kernel,
        out_shape=jax.ShapeDtypeStruct((B, Cout, HW), x_nchw.dtype),
        grid_spec=pltpu.PrefetchScalarGridSpec(
            num_scalar_prefetch=0,
            grid=(grid_b,),
            in_specs=[
                pl.BlockSpec((block_b, Cin, HW), lambda i: (i, 0, 0)),
                pl.BlockSpec((Cout, K), lambda i: (0, 0)),       # resident
                pl.BlockSpec((Cout, 1), lambda i: (0, 0)),       # resident
                pl.BlockSpec((2, HW), lambda i: (0, 0)),         # resident
            ],
            out_specs=pl.BlockSpec((block_b, Cout, HW), lambda i: (i, 0, 0)),
            scratch_shapes=[pltpu.VMEM((K, HW), jnp.float32)],   # im2col buffer
        ),
        compiler_params=pltpu.CompilerParams(
            dimension_semantics=("parallel",)),
    )(x_flat, w2d, b2d, hw_idx)

    # Free metadata reshape back to NCHW.
    return out_flat.reshape(B, Cout, H, W)


if __name__ == "__main__":
    key = jax.random.PRNGKey(0)
    k1, k2, k3 = jax.random.split(key, 3)

    B, Cin, H, W = 2, 4, 16, 16
    Cout, Ksz = 8, 3

    x = jax.random.normal(k1, (B, Cin, H, W), dtype=jnp.float32)

    # Deterministic synthetic "Conv2d" parameter init (same shapes / fan-in
    # scaling as nn.Conv2d); this is NOT a checkpoint load.
    fan_in = Cin * Ksz * Ksz
    bound = 1.0 / (fan_in ** 0.5)
    weight = jax.random.uniform(k2, (Cout, Cin, Ksz, Ksz),
                                minval=-bound, maxval=bound, dtype=jnp.float32)
    bias = jax.random.uniform(k3, (Cout,),
                              minval=-bound, maxval=bound, dtype=jnp.float32)

    out = signal_conv2d(x, weight, bias)
    out = jax.block_until_ready(out)

    # Reference: XLA conv with the same NCHW semantics as torch Conv2d + ReLU.
    ref = jax.lax.conv_general_dilated(
        x, weight, window_strides=(1, 1), padding="SAME",
        dimension_numbers=("NCHW", "OIHW", "NCHW"))
    ref = jnp.maximum(ref + bias.reshape(1, Cout, 1, 1), 0.0)

    assert out.shape == (B, Cout, H, W)
    # bf16 MXU inputs with f32 accumulation -> widened tolerance vs f32 reference.
    assert jnp.allclose(out, ref, atol=5e-2, rtol=5e-2), \
        float(jnp.max(jnp.abs(out - ref)))

    print("KERNEL_OK")
</pallas_src>

<mosaic_0001>
module attributes {stable_mosaic.version = 11 : i64} {
  func.func @_conv_relu_kernel(%arg0: i32, %arg1: memref<1x4x256xf32, #tpu.memory_space<vmem>>, %arg2: memref<8x36xbf16, #tpu.memory_space<vmem>>, %arg3: memref<8x1xf32, #tpu.memory_space<vmem>>, %arg4: memref<2x256xi32, #tpu.memory_space<vmem>>, %arg5: memref<1x8x256xf32, #tpu.memory_space<vmem>>, %arg6: memref<36x256xf32, #tpu.memory_space<vmem>>) attributes {dimension_semantics = [#tpu.dimension_semantics<parallel>], iteration_bounds = array<i64: 2>, scalar_prefetch = 0 : i64, scratch_operands = 1 : i64, tpu.core_type = #tpu.core_type<tc>, window_params = [{transform_indices = @transform_0, window_bounds = array<i64: 1, 4, 256>}, {pipeline_mode = #tpu.pipeline_mode<synchronous>, transform_indices = @transform_1, window_bounds = array<i64: 8, 36>}, {pipeline_mode = #tpu.pipeline_mode<synchronous>, transform_indices = @transform_2, window_bounds = array<i64: 8, 1>}, {pipeline_mode = #tpu.pipeline_mode<synchronous>, transform_indices = @transform_3, window_bounds = array<i64: 2, 256>}, {transform_indices = @transform_4, window_bounds = array<i64: 1, 8, 256>}]} {
    %c0 = arith.constant 0 : index
    %c0_0 = arith.constant 0 : index
    %0 = vector.load %arg2[%c0, %c0_0] : memref<8x36xbf16, #tpu.memory_space<vmem>>, vector<8x36xbf16>
    %c0_1 = arith.constant 0 : index
    %c0_2 = arith.constant 0 : index
    %1 = vector.load %arg3[%c0_1, %c0_2] : memref<8x1xf32, #tpu.memory_space<vmem>>, vector<8x1xf32>
    %c0_3 = arith.constant 0 : index
    %c0_4 = arith.constant 0 : index
    %2 = vector.load %arg4[%c0_3, %c0_4] : memref<2x256xi32, #tpu.memory_space<vmem>>, vector<1x256xi32>
    %3 = vector.shape_cast %2 : vector<1x256xi32> to vector<1x256xi32>
    %4 = vector.broadcast %3 : vector<1x256xi32> to vector<4x256xi32>
    %c1 = arith.constant 1 : index
    %c0_5 = arith.constant 0 : index
    %5 = vector.load %arg4[%c1, %c0_5] : memref<2x256xi32, #tpu.memory_space<vmem>>, vector<1x256xi32>
    %6 = vector.shape_cast %5 : vector<1x256xi32> to vector<1x256xi32>
    %7 = vector.broadcast %6 : vector<1x256xi32> to vector<4x256xi32>
    %c1_i32 = arith.constant 1 : i32
    %8 = vector.broadcast %c1_i32 : i32 to vector<4x256xi32>
    %9 = arith.cmpi sge, %4, %8 : vector<4x256xi32>
    %c17_i32 = arith.constant 17 : i32
    %10 = vector.broadcast %c17_i32 : i32 to vector<4x256xi32>
    %11 = arith.cmpi slt, %4, %10 : vector<4x256xi32>
    %12 = arith.andi %9, %11 : vector<4x256xi1>
    %c1_i32_6 = arith.constant 1 : i32
    %13 = vector.broadcast %c1_i32_6 : i32 to vector<4x256xi32>
    %14 = arith.cmpi sge, %7, %13 : vector<4x256xi32>
    %15 = arith.andi %12, %14 : vector<4x256xi1>
    %c17_i32_7 = arith.constant 17 : i32
    %16 = vector.broadcast %c17_i32_7 : i32 to vector<4x256xi32>
    %17 = arith.cmpi slt, %7, %16 : vector<4x256xi32>
    %18 = arith.andi %15, %17 : vector<4x256xi1>
    %c1_i32_8 = arith.constant 1 : i32
    %19 = vector.broadcast %c1_i32_8 : i32 to vector<4x256xi32>
    %20 = arith.cmpi sge, %4, %19 : vector<4x256xi32>
    %c17_i32_9 = arith.constant 17 : i32
    %21 = vector.broadcast %c17_i32_9 : i32 to vector<4x256xi32>
    %22 = arith.cmpi slt, %4, %21 : vector<4x256xi32>
    %23 = arith.andi %20, %22 : vector<4x256xi1>
    %c0_i32 = arith.constant 0 : i32
    %24 = vector.broadcast %c0_i32 : i32 to vector<4x256xi32>
    %25 = arith.cmpi sge, %7, %24 : vector<4x256xi32>
    %26 = arith.andi %23, %25 : vector<4x256xi1>
    %c16_i32 = arith.constant 16 : i32
    %27 = vector.broadcast %c16_i32 : i32 to vector<4x256xi32>
    %28 = arith.cmpi slt, %7, %27 : vector<4x256xi32>
    %29 = arith.andi %26, %28 : vector<4x256xi1>
    %c1_i32_10 = arith.constant 1 : i32
    %30 = vector.broadcast %c1_i32_10 : i32 to vector<4x256xi32>
    %31 = arith.cmpi sge, %4, %30 : vector<4x256xi32>
    %c17_i32_11 = arith.constant 17 : i32
    %32 = vector.broadcast %c17_i32_11 : i32 to vector<4x256xi32>
    %33 = arith.cmpi slt, %4, %32 : vector<4x256xi32>
    %34 = arith.andi %31, %33 : vector<4x256xi1>
    %c-1_i32 = arith.constant -1 : i32
    %35 = vector.broadcast %c-1_i32 : i32 to vector<4x256xi32>
    %36 = arith.cmpi sge, %7, %35 : vector<4x256xi32>
    %37 = arith.andi %34, %36 : vector<4x256xi1>
    %c15_i32 = arith.constant 15 : i32
    %38 = vector.broadcast %c15_i32 : i32 to vector<4x256xi32>
    %39 = arith.cmpi slt, %7, %38 : vector<4x256xi32>
    %40 = arith.andi %37, %39 : vector<4x256xi1>
    %c0_i32_12 = arith.constant 0 : i32
    %41 = vector.broadcast %c0_i32_12 : i32 to vector<4x256xi32>
    %42 = arith.cmpi sge, %4, %41 : vector<4x256xi32>
    %c16_i32_13 = arith.constant 16 : i32
    %43 = vector.broadcast %c16_i32_13 : i32 to vector<4x256xi32>
    %44 = arith.cmpi slt, %4, %43 : vector<4x256xi32>
    %45 = arith.andi %42, %44 : vector<4x256xi1>
    %c1_i32_14 = arith.constant 1 : i32
    %46 = vector.broadcast %c1_i32_14 : i32 to vector<4x256xi32>
    %47 = arith.cmpi sge, %7, %46 : vector<4x256xi32>
    %48 = arith.andi %45, %47 : vector<4x256xi1>
    %c17_i32_15 = arith.constant 17 : i32
    %49 = vector.broadcast %c17_i32_15 : i32 to vector<4x256xi32>
    %50 = arith.cmpi slt, %7, %49 : vector<4x256xi32>
    %51 = arith.andi %48, %50 : vector<4x256xi1>
    %c0_i32_16 = arith.constant 0 : i32
    %52 = vector.broadcast %c0_i32_16 : i32 to vector<4x256xi32>
    %53 = arith.cmpi sge, %4, %52 : vector<4x256xi32>
    %c16_i32_17 = arith.constant 16 : i32
    %54 = vector.broadcast %c16_i32_17 : i32 to vector<4x256xi32>
    %55 = arith.cmpi slt, %4, %54 : vector<4x256xi32>
    %56 = arith.andi %53, %55 : vector<4x256xi1>
    %c-1_i32_18 = arith.constant -1 : i32
    %57 = vector.broadcast %c-1_i32_18 : i32 to vector<4x256xi32>
    %58 = arith.cmpi sge, %7, %57 : vector<4x256xi32>
    %59 = arith.andi %56, %58 : vector<4x256xi1>
    %c15_i32_19 = arith.constant 15 : i32
    %60 = vector.broadcast %c15_i32_19 : i32 to vector<4x256xi32>
    %61 = arith.cmpi slt, %7, %60 : vector<4x256xi32>
    %62 = arith.andi %59, %61 : vector<4x256xi1>
    %c-1_i32_20 = arith.constant -1 : i32
    %63 = vector.broadcast %c-1_i32_20 : i32 to vector<4x256xi32>
    %64 = arith.cmpi sge, %4, %63 : vector<4x256xi32>
    %c15_i32_21 = arith.constant 15 : i32
    %65 = vector.broadcast %c15_i32_21 : i32 to vector<4x256xi32>
    %66 = arith.cmpi slt, %4, %65 : vector<4x256xi32>
    %67 = arith.andi %64, %66 : vector<4x256xi1>
    %c1_i32_22 = arith.constant 1 : i32
    %68 = vector.broadcast %c1_i32_22 : i32 to vector<4x256xi32>
    %69 = arith.cmpi sge, %7, %68 : vector<4x256xi32>
    %70 = arith.andi %67, %69 : vector<4x256xi1>
    %c17_i32_23 = arith.constant 17 : i32
    %71 = vector.broadcast %c17_i32_23 : i32 to vector<4x256xi32>
    %72 = arith.cmpi slt, %7, %71 : vector<4x256xi32>
    %73 = arith.andi %70, %72 : vector<4x256xi1>
    %c-1_i32_24 = arith.constant -1 : i32
    %74 = vector.broadcast %c-1_i32_24 : i32 to vector<4x256xi32>
    %75 = arith.cmpi sge, %4, %74 : vector<4x256xi32>
    %c15_i32_25 = arith.constant 15 : i32
    %76 = vector.broadcast %c15_i32_25 : i32 to vector<4x256xi32>
    %77 = arith.cmpi slt, %4, %76 : vector<4x256xi32>
    %78 = arith.andi %75, %77 : vector<4x256xi1>
    %c0_i32_26 = arith.constant 0 : i32
    %79 = vector.broadcast %c0_i32_26 : i32 to vector<4x256xi32>
    %80 = arith.cmpi sge, %7, %79 : vector<4x256xi32>
    %81 = arith.andi %78, %80 : vector<4x256xi1>
    %c16_i32_27 = arith.constant 16 : i32
    %82 = vector.broadcast %c16_i32_27 : i32 to vector<4x256xi32>
    %83 = arith.cmpi slt, %7, %82 : vector<4x256xi32>
    %84 = arith.andi %81, %83 : vector<4x256xi1>
    %c-1_i32_28 = arith.constant -1 : i32
    %85 = vector.broadcast %c-1_i32_28 : i32 to vector<4x256xi32>
    %86 = arith.cmpi sge, %4, %85 : vector<4x256xi32>
    %c15_i32_29 = arith.constant 15 : i32
    %87 = vector.broadcast %c15_i32_29 : i32 to vector<4x256xi32>
    %88 = arith.cmpi slt, %4, %87 : vector<4x256xi32>
    %89 = arith.andi %86, %88 : vector<4x256xi1>
    %c-1_i32_30 = arith.constant -1 : i32
    %90 = vector.broadcast %c-1_i32_30 : i32 to vector<4x256xi32>
    %91 = arith.cmpi sge, %7, %90 : vector<4x256xi32>
    %92 = arith.andi %89, %91 : vector<4x256xi1>
    %c15_i32_31 = arith.constant 15 : i32
    %93 = vector.broadcast %c15_i32_31 : i32 to vector<4x256xi32>
    %94 = arith.cmpi slt, %7, %93 : vector<4x256xi32>
    %95 = arith.andi %92, %94 : vector<4x256xi1>
    %c0_32 = arith.constant 0 : index
    %c0_33 = arith.constant 0 : index
    %c0_34 = arith.constant 0 : index
    %96 = vector.load %arg1[%c0_32, %c0_33, %c0_34] : memref<1x4x256xf32, #tpu.memory_space<vmem>>, vector<1x4x256xf32>
    %97 = vector.shape_cast %96 : vector<1x4x256xf32> to vector<4x256xf32>
    %c17_i32_35 = arith.constant 17 : i32
    %98 = tpu.dynamic_rotate %97 by %c17_i32_35 dim 1 : vector<4x256xf32>, i32 -> vector<4x256xf32>
    %cst = arith.constant 0.000000e+00 : f32
    %99 = vector.broadcast %cst : f32 to vector<4x256xf32>
    %100 = arith.select %18, %98, %99 : vector<4x256xi1>, vector<4x256xf32>
    %c0_36 = arith.constant 0 : index
    %c0_37 = arith.constant 0 : index
    %101 = vector.load %arg6[%c0_36, %c0_37] : memref<36x256xf32, #tpu.memory_space<vmem>>, vector<4x256xf32>
    tpu.vector_store %arg6[%c0_36, %c0_37], %100 {strides = array<i32>} : memref<36x256xf32, #tpu.memory_space<vmem>>, vector<4x256xf32>,
    %c16_i32_38 = arith.constant 16 : i32
    %102 = tpu.dynamic_rotate %97 by %c16_i32_38 dim 1 : vector<4x256xf32>, i32 -> vector<4x256xf32>
    %cst_39 = arith.constant 0.000000e+00 : f32
    %103 = vector.broadcast %cst_39 : f32 to vector<4x256xf32>
    %104 = arith.select %29, %102, %103 : vector<4x256xi1>, vector<4x256xf32>
    %c4 = arith.constant 4 : index
    %c0_40 = arith.constant 0 : index
    %105 = vector.load %arg6[%c4, %c0_40] : memref<36x256xf32, #tpu.memory_space<vmem>>, vector<4x256xf32>
    tpu.vector_store %arg6[%c4, %c0_40], %104 {strides = array<i32>} : memref<36x256xf32, #tpu.memory_space<vmem>>, vector<4x256xf32>,
    %c15_i32_41 = arith.constant 15 : i32
    %106 = tpu.dynamic_rotate %97 by %c15_i32_41 dim 1 : vector<4x256xf32>, i32 -> vector<4x256xf32>
    %cst_42 = arith.constant 0.000000e+00 : f32
    %107 = vector.broadcast %cst_42 : f32 to vector<4x256xf32>
    %108 = arith.select %40, %106, %107 : vector<4x256xi1>, vector<4x256xf32>
    %c8 = arith.constant 8 : index
    %c0_43 = arith.constant 0 : index
    %109 = vector.load %arg6[%c8, %c0_43] : memref<36x256xf32, #tpu.memory_space<vmem>>, vector<4x256xf32>
    tpu.vector_store %arg6[%c8, %c0_43], %108 {strides = array<i32>} : memref<36x256xf32, #tpu.memory_space<vmem>>, vector<4x256xf32>,
    %c1_i32_44 = arith.constant 1 : i32
    %110 = tpu.dynamic_rotate %97 by %c1_i32_44 dim 1 : vector<4x256xf32>, i32 -> vector<4x256xf32>
    %cst_45 = arith.constant 0.000000e+00 : f32
    %111 = vector.broadcast %cst_45 : f32 to vector<4x256xf32>
    %112 = arith.select %51, %110, %111 : vector<4x256xi1>, vector<4x256xf32>
    %c12 = arith.constant 12 : index
    %c0_46 = arith.constant 0 : index
    %113 = vector.load %arg6[%c12, %c0_46] : memref<36x256xf32, #tpu.memory_space<vmem>>, vector<4x256xf32>
    tpu.vector_store %arg6[%c12, %c0_46], %112 {strides = array<i32>} : memref<36x256xf32, #tpu.memory_space<vmem>>, vector<4x256xf32>,
    %c16 = arith.constant 16 : index
    %c0_47 = arith.constant 0 : index
    %114 = vector.load %arg6[%c16, %c0_47] : memref<36x256xf32, #tpu.memory_space<vmem>>, vector<4x256xf32>
    tpu.vector_store %arg6[%c16, %c0_47], %97 {strides = array<i32>} : memref<36x256xf32, #tpu.memory_space<vmem>>, vector<4x256xf32>,
    %c255_i32 = arith.constant 255 : i32
    %115 = tpu.dynamic_rotate %97 by %c255_i32 dim 1 : vector<4x256xf32>, i32 -> vector<4x256xf32>
    %cst_48 = arith.constant 0.000000e+00 : f32
    %116 = vector.broadcast %cst_48 : f32 to vector<4x256xf32>
    %117 = arith.select %62, %115, %116 : vector<4x256xi1>, vector<4x256xf32>
    %c20 = arith.constant 20 : index
    %c0_49 = arith.constant 0 : index
    %118 = vector.load %arg6[%c20, %c0_49] : memref<36x256xf32, #tpu.memory_space<vmem>>, vector<4x256xf32>
    tpu.vector_store %arg6[%c20, %c0_49], %117 {strides = array<i32>} : memref<36x256xf32, #tpu.memory_space<vmem>>, vector<4x256xf32>,
    %c241_i32 = arith.constant 241 : i32
    %119 = tpu.dynamic_rotate %97 by %c241_i32 dim 1 : vector<4x256xf32>, i32 -> vector<4x256xf32>
    %cst_50 = arith.constant 0.000000e+00 : f32
    %120 = vector.broadcast %cst_50 : f32 to vector<4x256xf32>
    %121 = arith.select %73, %119, %120 : vector<4x256xi1>, vector<4x256xf32>
    %c24 = arith.constant 24 : index
    %c0_51 = arith.constant 0 : index
    %122 = vector.load %arg6[%c24, %c0_51] : memref<36x256xf32, #tpu.memory_space<vmem>>, vector<4x256xf32>
    tpu.vector_store %arg6[%c24, %c0_51], %121 {strides = array<i32>} : memref<36x256xf32, #tpu.memory_space<vmem>>, vector<4x256xf32>,
    %c240_i32 = arith.constant 240 : i32
    %123 = tpu.dynamic_rotate %97 by %c240_i32 dim 1 : vector<4x256xf32>, i32 -> vector<4x256xf32>
    %cst_52 = arith.constant 0.000000e+00 : f32
    %124 = vector.broadcast %cst_52 : f32 to vector<4x256xf32>
    %125 = arith.select %84, %123, %124 : vector<4x256xi1>, vector<4x256xf32>
    %c28 = arith.constant 28 : index
    %c0_53 = arith.constant 0 : index
    %126 = vector.load %arg6[%c28, %c0_53] : memref<36x256xf32, #tpu.memory_space<vmem>>, vector<4x256xf32>
    tpu.vector_store %arg6[%c28, %c0_53], %125 {strides = array<i32>} : memref<36x256xf32, #tpu.memory_space<vmem>>, vector<4x256xf32>,
    %c239_i32 = arith.constant 239 : i32
    %127 = tpu.dynamic_rotate %97 by %c239_i32 dim 1 : vector<4x256xf32>, i32 -> vector<4x256xf32>
    %cst_54 = arith.constant 0.000000e+00 : f32
    %128 = vector.broadcast %cst_54 : f32 to vector<4x256xf32>
    %129 = arith.select %95, %127, %128 : vector<4x256xi1>, vector<4x256xf32>
    %c32 = arith.constant 32 : index
    %c0_55 = arith.constant 0 : index
    %130 = vector.load %arg6[%c32, %c0_55] : memref<36x256xf32, #tpu.memory_space<vmem>>, vector<4x256xf32>
    tpu.vector_store %arg6[%c32, %c0_55], %129 {strides = array<i32>} : memref<36x256xf32, #tpu.memory_space<vmem>>, vector<4x256xf32>,
    %c0_56 = arith.constant 0 : index
    %c0_57 = arith.constant 0 : index
    %131 = vector.load %arg6[%c0_56, %c0_57] : memref<36x256xf32, #tpu.memory_space<vmem>>, vector<36x256xf32>
    %132 = arith.truncf %131 : vector<36x256xf32> to vector<36x256xbf16>
    %cst_58 = arith.constant dense<0.000000e+00> : vector<8x256xf32>
    %133 = tpu.matmul %0, %132, %cst_58 {dimension_numbers = #tpu.dot_dimension_numbers<[1], [0], [0], [1], [0, 0, 1, 1], [], []>} : vector<8x36xbf16>, vector<36x256xbf16>, vector<8x256xf32> -> vector<8x256xf32>
    %134 = vector.broadcast %1 : vector<8x1xf32> to vector<8x256xf32>
    %135 = arith.addf %133, %134 : vector<8x256xf32>
    %cst_59 = arith.constant 0.000000e+00 : f32
    %136 = vector.broadcast %cst_59 : f32 to vector<8x256xf32>
    %137 = arith.maximumf %135, %136 : vector<8x256xf32>
    %c0_60 = arith.constant 0 : index
    %c0_61 = arith.constant 0 : index
    %c0_62 = arith.constant 0 : index
    %138 = vector.load %arg5[%c0_60, %c0_61, %c0_62] : memref<1x8x256xf32, #tpu.memory_space<vmem>>, vector<1x8x256xf32>
    %139 = vector.shape_cast %138 : vector<1x8x256xf32> to vector<8x256xf32>
    %140 = vector.shape_cast %137 : vector<8x256xf32> to vector<1x8x256xf32>
    tpu.vector_store %arg5[%c0_60, %c0_61, %c0_62], %140 {strides = array<i32>} : memref<1x8x256xf32, #tpu.memory_space<vmem>>, vector<1x8x256xf32>,
    return
  }
  func.func @transform_0(%arg0: i32) -> (i32, i32, i32) {
    %c0_i32 = arith.constant 0 : i32
    %c0_i32_0 = arith.constant 0 : i32
    %c0_i32_1 = arith.constant 0 : i32
    return %arg0, %c0_i32, %c0_i32_0 : i32, i32, i32
  }
  func.func @transform_1(%arg0: i32) -> (i32, i32) {
    %c0_i32 = arith.constant 0 : i32
    %c0_i32_0 = arith.constant 0 : i32
    %c0_i32_1 = arith.constant 0 : i32
    return %c0_i32, %c0_i32_0 : i32, i32
  }
  func.func @transform_2(%arg0: i32) -> (i32, i32) {
    %c0_i32 = arith.constant 0 : i32
    %c0_i32_0 = arith.constant 0 : i32
    %c0_i32_1 = arith.constant 0 : i32
    return %c0_i32, %c0_i32_0 : i32, i32
  }
  func.func @transform_3(%arg0: i32) -> (i32, i32) {
    %c0_i32 = arith.constant 0 : i32
    %c0_i32_0 = arith.constant 0 : i32
    %c0_i32_1 = arith.constant 0 : i32
    return %c0_i32, %c0_i32_0 : i32, i32
  }
  func.func @transform_4(%arg0: i32) -> (i32, i32, i32) {
    %c0_i32 = arith.constant 0 : i32
    %c0_i32_0 = arith.constant 0 : i32
    %c0_i32_1 = arith.constant 0 : i32
    return %arg0, %c0_i32, %c0_i32_0 : i32, i32, i32
  }
}

</mosaic_0001>

<llo_original>
// kernel: tpu_custom_call.1
$region0: #{tpu_custom_call.1}
  #allocation0 [shape = 'u32[]', space=smem, size = 0x4, offset = 0x4, fixed_abs, tag = 'smem constant byte address 0x4 - core index']
  #allocation1 [shape = 'u32[144,128]{1,0:T(1,128)}', space=vmem, size = 0x12000, scoped, tag = 'internal scratch']
  #allocation2 [shape = 'f32[36,256]{1,0:T(8,128)}', space=vmem, size = 0xa000, scoped, tag = 'scratch operand']
  %s0 = inlined_call_operand.hbm [shape: f32[2,4,256], index: 0, kind: input, shape index: {}]
  %s1 = inlined_call_operand.vmem [shape: bf16[8,36], index: 1, kind: input, shape index: {}]
  %s2 = inlined_call_operand.vmem [shape: f32[8,1], index: 2, kind: input, shape index: {}]
  %s3 = inlined_call_operand.vmem [shape: s32[2,256], index: 3, kind: input, shape index: {}]
  %s4 = inlined_call_operand.hbm [shape: f32[2,8,256], index: 4, kind: output, shape index: {}]
  %s5 = sld [smem:[#allocation0]]
  $region53: #{tpu_custom_call.1} parent=0
    _
  %s7 = ssub.s32 1, %s5
  %s8 = scalar_select 0, %s7, %s5
  $region1: #{tpu_custom_call.1} parent=0
    #allocation3 [shape = 'u8[8192]{0}', space=vmem, size = 0x2000, scoped, tag = 'input window, operand 0']
    #allocation4 [shape = 's32[2]{0}', space=sflag, size = 0x8, scoped, tag = 'scoped memory for tpu_custom_call.1']
    #allocation5 [shape = 's32[2]{0}', space=sflag, size = 0x8, scoped, tag = 'scoped memory for tpu_custom_call.1']
    #allocation6 [shape = 'u8[16384]{0}', space=vmem, size = 0x4000, scoped, tag = 'output window, operand 0']
    %9 = vsyncpa [#allocation4], 0
    %s10 = scalar_lea.sflag [#allocation4], 1
    %11 = vsyncpa %s10, 0
    %12 = vsyncpa [#allocation5], 0
    %s13 = scalar_lea.sflag [#allocation5], 1
    %14 = vsyncpa %s13, 0
    loop: start=0, step=1, limit=4
    $region2: #{tpu_custom_call.1} parent=1 // loop_pre_header
      _
    $region3: #{tpu_custom_call.1} parent=1 // loop_header
      %s16 = sphi 0, %s20
      %p17 = scmp.ge.s32.totalorder %s16, 4
      %s26 = sphi 0, %s28
      %s29 = sphi 0, %s26
      %s30 = sphi 0, %s29
      %s46 = sphi 0, %s30
      %s50 = sphi 0, %s50
      %s52 = sphi 0, %s50
      %s53 = sphi 0, %s52
      %s67 = sphi 0, %s53
      %s71 = sphi 0, %s71
      %s73 = sphi 0, %s71
      %s74 = sphi 0, %s73
      %s88 = sphi 0, %s74
      %s92 = sphi 0, %s92
      %s94 = sphi 0, %s92
      %s95 = sphi 0, %s94
      %s109 = sphi 0, %s95
      %s115 = sphi 0, %s117
      %s118 = sphi 0, %s115
      %s119 = sphi 0, %s118
      %s135 = sphi 0, %s119
    $region4: #{tpu_custom_call.1} parent=1 // loop_header_branch
      %19 = sbr.rel (%p17) target = $region8
    $region5: #{tpu_custom_call.1} parent=1 // loop_body
      %s21 = ssub.s32 %s16, 1
      %s22 = ssub.s32 %s16, 2
      %s23 = sadd.s32 %s16, 1
      %s24 = ssub.s32 %s16, %s23
      %p25 = scmp.eq.s32.totalorder %s24, 0
      %s27 = sadd.s32 %s26, 1
      %s28 = scalar_select %p25, %s26, %s27
      %p31 = pneg %p25
      %p32 = scmp.eq.s32.totalorder %s16, 1
      %p33 = por %p31, %p32
      %p34 = scmp.ne.s32.totalorder %s26, %s29
      %p35 = scmp.eq.s32.totalorder %s16, 0
      %p36 = por %p34, %p35
      %p37 = scmp.ne.s32.totalorder %s26, %s29
      %p38 = scmp.eq.s32.totalorder %s21, 1
      %p39 = por %p37, %p38
      %p40 = scmp.ne.s32.totalorder %s29, %s30
      %p41 = scmp.eq.s32.totalorder %s21, 0
      %p42 = por %p40, %p41
      %p43 = scmp.ne.s32.totalorder %s29, %s30
      %p44 = scmp.eq.s32.totalorder %s22, 1
      %p45 = por %p43, %p44
      %p47 = scmp.ne.s32.totalorder %s30, %s46
      %p48 = scmp.eq.s32.totalorder %s22, 0
      %p49 = por %p47, %p48
      %s51 = sadd.s32 %s50, 1
      %p54 = scmp.eq.s32.totalorder %s16, 1
      %p55 = scmp.ne.s32.totalorder %s50, %s52
      %p56 = scmp.eq.s32.totalorder %s16, 0
      %p57 = por %p55, %p56
      %p58 = scmp.ne.s32.totalorder %s50, %s52
      %p59 = scmp.eq.s32.totalorder %s21, 1
      %p60 = por %p58, %p59
      %p61 = scmp.ne.s32.totalorder %s52, %s53
      %p62 = scmp.eq.s32.totalorder %s21, 0
      %p63 = por %p61, %p62
      %p64 = scmp.ne.s32.totalorder %s52, %s53
      %p65 = scmp.eq.s32.totalorder %s22, 1
      %p66 = por %p64, %p65
      %p68 = scmp.ne.s32.totalorder %s53, %s67
      %p69 = scmp.eq.s32.totalorder %s22, 0
      %p70 = por %p68, %p69
      %s72 = sadd.s32 %s71, 1
      %p75 = scmp.eq.s32.totalorder %s16, 1
      %p76 = scmp.ne.s32.totalorder %s71, %s73
      %p77 = scmp.eq.s32.totalorder %s16, 0
      %p78 = por %p76, %p77
      %p79 = scmp.ne.s32.totalorder %s71, %s73
      %p80 = scmp.eq.s32.totalorder %s21, 1
      %p81 = por %p79, %p80
      %p82 = scmp.ne.s32.totalorder %s73, %s74
      %p83 = scmp.eq.s32.totalorder %s21, 0
      %p84 = por %p82, %p83
      %p85 = scmp.ne.s32.totalorder %s73, %s74
      %p86 = scmp.eq.s32.totalorder %s22, 1
      %p87 = por %p85, %p86
      %p89 = scmp.ne.s32.totalorder %s74, %s88
      %p90 = scmp.eq.s32.totalorder %s22, 0
      %p91 = por %p89, %p90
      %s93 = sadd.s32 %s92, 1
      %p96 = scmp.eq.s32.totalorder %s16, 1
      %p97 = scmp.ne.s32.totalorder %s92, %s94
      %p98 = scmp.eq.s32.totalorder %s16, 0
      %p99 = por %p97, %p98
      %p100 = scmp.ne.s32.totalorder %s92, %s94
      %p101 = scmp.eq.s32.totalorder %s21, 1
      %p102 = por %p100, %p101
      %p103 = scmp.ne.s32.totalorder %s94, %s95
      %p104 = scmp.eq.s32.totalorder %s21, 0
      %p105 = por %p103, %p104
      %p106 = scmp.ne.s32.totalorder %s94, %s95
      %p107 = scmp.eq.s32.totalorder %s22, 1
      %p108 = por %p106, %p107
      %p110 = scmp.ne.s32.totalorder %s95, %s109
      %p111 = scmp.eq.s32.totalorder %s22, 0
      %p112 = por %p110, %p111
      %s113 = ssub.s32 %s16, %s23
      %p114 = scmp.eq.s32.totalorder %s113, 0
      %s116 = sadd.s32 %s115, 1
      %s117 = scalar_select %p114, %s115, %s116
      %p120 = pneg %p114
      %p121 = scmp.eq.s32.totalorder %s16, 1
      %p122 = por %p120, %p121
      %p123 = scmp.ne.s32.totalorder %s115, %s118
      %p124 = scmp.eq.s32.totalorder %s16, 0
      %p125 = por %p123, %p124
      %p126 = scmp.ne.s32.totalorder %s115, %s118
      %p127 = scmp.eq.s32.totalorder %s21, 1
      %p128 = por %p126, %p127
      %p129 = scmp.ne.s32.totalorder %s118, %s119
      %p130 = scmp.eq.s32.totalorder %s21, 0
      %p131 = por %p129, %p130
      %p132 = scmp.ne.s32.totalorder %s118, %s119
      %p133 = scmp.eq.s32.totalorder %s22, 1
      %p134 = por %p132, %p133
      %p136 = scmp.ne.s32.totalorder %s119, %s135
      %p137 = scmp.eq.s32.totalorder %s22, 0
      %p138 = por %p136, %p137
      %p139 = scmp.le.s32.totalorder 1, %s16
      %p140 = scmp.lt.s32.totalorder %s16, 3
      %p141 = pnand %p139, %p140
      %p142 = pneg %p141
      // Predicated region
      $region9: #{tpu_custom_call.1} parent=5 // pred_check
        _
      $region10: #{tpu_custom_call.1} parent=5 // pred_check_branch
        %144 = sbr.rel (%p141) target = $region12
      $region11: #{tpu_custom_call.1} parent=5 // pred_region
        %s145 = ssub.s32 %s16, 1
        // Predicated region
        $region13: #{tpu_custom_call.1} parent=11 // pred_check
          %p146 = pneg %p63
        $region14: #{tpu_custom_call.1} parent=11 // pred_check_branch
          %148 = sbr.rel (%p146) target = $region16
        $region15: #{tpu_custom_call.1} parent=11 // pred_region
          _
        $region16: #{tpu_custom_call.1} parent=11 // pred_fallthru
          _
        // Predicated region
        $region17: #{tpu_custom_call.1} parent=11 // pred_check
          %p149 = pneg %p84
        $region18: #{tpu_custom_call.1} parent=11 // pred_check_branch
          %151 = sbr.rel (%p149) target = $region20
        $region19: #{tpu_custom_call.1} parent=11 // pred_region
          _
        $region20: #{tpu_custom_call.1} parent=11 // pred_fallthru
          _
        // Predicated region
        $region21: #{tpu_custom_call.1} parent=11 // pred_check
          %p152 = pneg %p105
        $region22: #{tpu_custom_call.1} parent=11 // pred_check_branch
          %154 = sbr.rel (%p152) target = $region24
        $region23: #{tpu_custom_call.1} parent=11 // pred_region
          _
        $region24: #{tpu_custom_call.1} parent=11 // pred_fallthru
          _
      $region12: #{tpu_custom_call.1} parent=5 // pred_fallthru
        _
      %p155 = scmp.lt.s32.totalorder %s16, 2
      // Predicated region
      $region25: #{tpu_custom_call.1} parent=5 // pred_check
        %p156 = pneg %p155
      $region26: #{tpu_custom_call.1} parent=5 // pred_check_branch
        %158 = sbr.rel (%p156) target = $region28
      $region27: #{tpu_custom_call.1} parent=5 // pred_region
        // Predicated region
        $region29: #{tpu_custom_call.1} parent=27 // pred_check
          %p159 = pneg %p36
        $region30: #{tpu_custom_call.1} parent=27 // pred_check_branch
          %161 = sbr.rel (%p159) target = $region32
        $region31: #{tpu_custom_call.1} parent=27 // pred_region
          %s162 = sand.u32 %s26, 1
          %s163 = scalar_lea.sflag [#allocation4], %s162
          %s164 = sand.u32 %s26, 1
          %s165 = smul.addr %s164, 8
          %s166 = scalar_lea.vmem [#allocation3], %s165
          %s168 = ssub.s32 128, 128
          %169 = vsyncadd %s163, %s168
          %s170 = smul.addr %s16, 2
          %s171 = smul.addr %s170, 64
          %s172 = scalar_lea.hbm %s0, %s171
          %s174 = sshll.u32 %s166, 4
          %s175 = int_to_ptr.vmem [resolvable:$true] %s174
          %177 = dma.hbm_to_vmem [thread:$0]  %s172, 128, %s175, %s163
        $region32: #{tpu_custom_call.1} parent=27 // pred_fallthru
          _
      $region28: #{tpu_custom_call.1} parent=5 // pred_fallthru
        _
      %p178 = scmp.le.s32.totalorder 1, %s16
      %p179 = scmp.lt.s32.totalorder %s16, 3
      %p180 = pnand %p178, %p179
      %p181 = pneg %p180
      // Predicated region
      $region33: #{tpu_custom_call.1} parent=5 // pred_check
        _
      $region34: #{tpu_custom_call.1} parent=5 // pred_check_branch
        %183 = sbr.rel (%p180) target = $region36
      $region35: #{tpu_custom_call.1} parent=5 // pred_region
        %s184 = ssub.s32 %s16, 1
        %s185 = sand.u32 %s29, 1
        %s186 = scalar_lea.sflag [#allocation4], %s185
        %s187 = sand.u32 %s29, 1
        %s188 = smul.addr %s187, 8
        %s189 = scalar_lea.vmem [#allocation3], %s188
        // Predicated region
        $region37: #{tpu_custom_call.1} parent=35 // pred_check
          %p190 = pneg %p42
        $region38: #{tpu_custom_call.1} parent=35 // pred_check_branch
          %192 = sbr.rel (%p190) target = $region40
        $region39: #{tpu_custom_call.1} parent=35 // pred_region
          %193 = dma.done %s186, 128
        $region40: #{tpu_custom_call.1} parent=35 // pred_fallthru
          _
        %s194 = sand.u32 %s29, 1
        %s195 = scalar_lea.sflag [#allocation4], %s194
        %s196 = sand.u32 %s29, 1
        %s197 = smul.addr %s196, 8
        %s198 = scalar_lea.vmem [#allocation3], %s197
        %p199 = pneg %p42
        %p200 = pneg %p39
        %p201 = pneg %p63
        %p202 = pneg %p60
        %p203 = pneg %p84
        %p204 = pneg %p81
        %p205 = pneg %p105
        %p206 = pneg %p102
        %p207 = pneg %p131
        %p208 = pneg %p128
        %s209 = sand.u32 %s118, 1
        %s210 = scalar_lea.sflag [#allocation5], %s209
        %s211 = sand.u32 %s118, 1
        %s212 = smul.addr %s211, 16
        %s213 = scalar_lea.vmem [#allocation6], %s212
        %v215 = vld [vmem:[%s1] sm:$0xf]
        %v216 = vld [vmem:[%s2] sm:$0xff]
        %v217 = vld [vmem:[%s3] ss:$2 sm:$0x3]
        %v218 = vlaneseq
        %v219 = vshrl.u32 %v218, 7
        %v220 = vsub.s32 0, %v219
        %v221 = vrot.slane %v217, %v220
        %v222 = vlaneseq
        %v223 = vshrl.u32 %v222, 7
        %v224 = vsub.s32 1, %v223
        %v225 = vrot.slane %v217, %v224
        %s226 = scalar_lea.vmem %s3, 1
        %v227 = vld [vmem:[%s226] ss:$2 sm:$0x3]
        %v228 = vlaneseq
        %v229 = vshrl.u32 %v228, 7
        %v230 = vsub.s32 0, %v229
        %v231 = vrot.slane %v227, %v230
        %v232 = vlaneseq
        %v233 = vshrl.u32 %v232, 7
        %v234 = vsub.s32 1, %v233
        %v235 = vrot.slane %v227, %v234
        %vm236 = vcmp.ge.s32.totalorder %v221, 1
        %vm237 = vcmp.ge.s32.totalorder %v225, 1
        %vm238 = vcmp.lt.s32.totalorder %v221, 17
        %vm239 = vcmp.lt.s32.totalorder %v225, 17
        %vm240 = vmand %vm236, %vm238
        %vm241 = vmand %vm237, %vm239
        %vm242 = vcmp.ge.s32.totalorder %v231, 1
        %vm243 = vcmp.ge.s32.totalorder %v235, 1
        %vm244 = vmand %vm240, %vm242
        %vm245 = vmand %vm241, %vm243
        %vm246 = vcmp.lt.s32.totalorder %v231, 17
        %vm247 = vcmp.lt.s32.totalorder %v235, 17
        %vm248 = vmand %vm244, %vm246
        %vm249 = vmand %vm245, %vm247
        %vm250 = vcmp.ge.s32.totalorder %v231, 0
        %vm251 = vcmp.ge.s32.totalorder %v235, 0
        %vm252 = vmand %vm240, %vm250
        %vm253 = vmand %vm241, %vm251
        %vm254 = vcmp.lt.s32.totalorder %v231, 16
        %vm255 = vcmp.lt.s32.totalorder %v235, 16
        %vm256 = vmand %vm252, %vm254
        %vm257 = vmand %vm253, %vm255
        %vm258 = vcmp.ge.s32.totalorder %v231, 4294967295
        %vm259 = vcmp.ge.s32.totalorder %v235, 4294967295
        %vm260 = vmand %vm240, %vm258
        %vm261 = vmand %vm241, %vm259
        %vm262 = vcmp.lt.s32.totalorder %v231, 15
        %vm263 = vcmp.lt.s32.totalorder %v235, 15
        %vm264 = vmand %vm260, %vm262
        %vm265 = vmand %vm261, %vm263
        %vm266 = vcmp.ge.s32.totalorder %v221, 0
        %vm267 = vcmp.ge.s32.totalorder %v225, 0
        %vm268 = vcmp.lt.s32.totalorder %v221, 16
        %vm269 = vcmp.lt.s32.totalorder %v225, 16
        %vm270 = vmand %vm266, %vm268
        %vm271 = vmand %vm267, %vm269
        %vm272 = vmand %vm270, %vm242
        %vm273 = vmand %vm271, %vm243
        %vm274 = vmand %vm272, %vm246
        %vm275 = vmand %vm273, %vm247
        %vm276 = vmand %vm270, %vm258
        %vm277 = vmand %vm271, %vm259
        %vm278 = vmand %vm276, %vm262
        %vm279 = vmand %vm277, %vm263
        %vm280 = vcmp.ge.s32.totalorder %v221, 4294967295
        %vm281 = vcmp.ge.s32.totalorder %v225, 4294967295
        %vm282 = vcmp.lt.s32.totalorder %v221, 15
        %vm283 = vcmp.lt.s32.totalorder %v225, 15
        %vm284 = vmand %vm280, %vm282
        %vm285 = vmand %vm281, %vm283
        %vm286 = vmand %vm284, %vm242
        %vm287 = vmand %vm285, %vm243
        %vm288 = vmand %vm286, %vm246
        %vm289 = vmand %vm287, %vm247
        %vm290 = vmand %vm284, %vm250
        %vm291 = vmand %vm285, %vm251
        %vm292 = vmand %vm290, %vm254
        %vm293 = vmand %vm291, %vm255
        %vm294 = vmand %vm284, %vm258
        %vm295 = vmand %vm285, %vm259
        %vm296 = vmand %vm294, %vm262
        %vm297 = vmand %vm295, %vm263
        %v298 = vld [vmem:[%s189] sm:$0xff]
        %v300 = vcombine.high %v298, %v298
        %302 = vrot.lane.b32.xlu0 %v298, 17
        %v303 = vpop.permute.xlu0 %302
        %304 = vrot.lane.b32.xlu0 %v300, 17
        %v305 = vpop.permute.xlu0 %304
        %v306 = vlaneseq
        %v307 = vand.u32 %v306, 127
        %vm308 = vcmp.lt.s32.totalorder %v307, 17
        %v309 = vsel %vm308, %v303, %v305
        %v310 = vsel %vm308, %v305, %v303
        %v311 = vsel %vm248, %v310, 0.0
        %v312 = vsel %vm249, %v309, 0.0
        %313 = vst [vmem:[#allocation2] sm:$0xf] %v311
        %314 = vst [vmem:[#allocation2 + $0x8] sm:$0xf] %v312
        %315 = vrot.lane.b32.xlu0 %v298, 16
        %v316 = vpop.permute.xlu0 %315
        %317 = vrot.lane.b32.xlu0 %v300, 16
        %v318 = vpop.permute.xlu0 %317
        %vm319 = vcmp.lt.s32.totalorder %v307, 16
        %v320 = vsel %vm319, %v316, %v318
        %v321 = vsel %vm319, %v318, %v316
        %v322 = vsel %vm256, %v321, 0.0
        %v323 = vsel %vm257, %v320, 0.0
        %v326 = vrot.slane %v322, 4
        %v327 = vrot.slane %v323, 4
        %330 = vst [vmem:[#allocation2] sm:$0xf0] %v326
        %331 = vst [vmem:[#allocation2 + $0x8] sm:$0xf0] %v327
        %332 = vrot.lane.b32.xlu0 %v298, 15
        %v333 = vpop.permute.xlu0 %332
        %334 = vrot.lane.b32.xlu0 %v300, 15
        %v335 = vpop.permute.xlu0 %334
        %vm336 = vcmp.lt.s32.totalorder %v307, 15
        %v337 = vsel %vm336, %v333, %v335
        %v338 = vsel %vm336, %v335, %v333
        %v339 = vsel %vm264, %v338, 0.0
        %v340 = vsel %vm265, %v337, 0.0
        %341 = vst [vmem:[#allocation2 + $0x10] sm:$0xf] %v339
        %342 = vst [vmem:[#allocation2 + $0x18] sm:$0xf] %v340
        %343 = vrot.lane.b32.xlu0 %v298, 1
        %v344 = vpop.permute.xlu0 %343
        %345 = vrot.lane.b32.xlu0 %v300, 1
        %v346 = vpop.permute.xlu0 %345
        %vm347 = vcmp.lt.s32.totalorder %v307, 1
        %v348 = vsel %vm347, %v344, %v346
        %v349 = vsel %vm347, %v346, %v344
        %v350 = vsel %vm274, %v349, 0.0
        %v351 = vsel %vm275, %v348, 0.0
        %v354 = vrot.slane %v350, 4
        %v355 = vrot.slane %v351, 4
        %358 = vst [vmem:[#allocation2 + $0x10] sm:$0xf0] %v354
        %359 = vst [vmem:[#allocation2 + $0x18] sm:$0xf0] %v355
        %360 = vst [vmem:[#allocation2 + $0x20] sm:$0xf] %v298
        %361 = vst [vmem:[#allocation2 + $0x28] sm:$0xf] %v300
        %362 = vrot.lane.b32.xlu0 %v298, 127
        %v363 = vpop.permute.xlu0 %362
        %364 = vrot.lane.b32.xlu0 %v300, 127
        %v365 = vpop.permute.xlu0 %364
        %vm366 = vcmp.lt.s32.totalorder %v307, 127
        %v367 = vsel %vm366, %v363, %v365
        %v368 = vsel %vm366, %v365, %v363
        %v369 = vsel %vm278, %v367, 0.0
        %v370 = vsel %vm279, %v368, 0.0
        %v373 = vrot.slane %v369, 4
        %v374 = vrot.slane %v370, 4
        %377 = vst [vmem:[#allocation2 + $0x20] sm:$0xf0] %v373
        %378 = vst [vmem:[#allocation2 + $0x28] sm:$0xf0] %v374
        %379 = vrot.lane.b32.xlu0 %v298, 113
        %v380 = vpop.permute.xlu0 %379
        %381 = vrot.lane.b32.xlu0 %v300, 113
        %v382 = vpop.permute.xlu0 %381
        %vm383 = vcmp.lt.s32.totalorder %v307, 113
        %v384 = vsel %vm383, %v380, %v382
        %v385 = vsel %vm383, %v382, %v380
        %v386 = vsel %vm288, %v384, 0.0
        %v387 = vsel %vm289, %v385, 0.0
        %388 = vst [vmem:[#allocation2 + $0x30] sm:$0xf] %v386
        %389 = vst [vmem:[#allocation2 + $0x38] sm:$0xf] %v387
        %390 = vrot.lane.b32.xlu0 %v298, 112
        %v391 = vpop.permute.xlu0 %390
        %392 = vrot.lane.b32.xlu0 %v300, 112
        %v393 = vpop.permute.xlu0 %392
        %vm394 = vcmp.lt.s32.totalorder %v307, 112
        %v395 = vsel %vm394, %v391, %v393
        %v396 = vsel %vm394, %v393, %v391
        %v397 = vsel %vm292, %v395, 0.0
        %v398 = vsel %vm293, %v396, 0.0
        %v401 = vrot.slane %v397, 4
        %v402 = vrot.slane %v398, 4
        %405 = vst [vmem:[#allocation2 + $0x30] sm:$0xf0] %v401
        %406 = vst [vmem:[#allocation2 + $0x38] sm:$0xf0] %v402
        %407 = vrot.lane.b32.xlu0 %v298, 111
        %v408 = vpop.permute.xlu0 %407
        %409 = vrot.lane.b32.xlu0 %v300, 111
        %v410 = vpop.permute.xlu0 %409
        %vm411 = vcmp.lt.s32.totalorder %v307, 111
        %v412 = vsel %vm411, %v408, %v410
        %v413 = vsel %vm411, %v410, %v408
        %v414 = vsel %vm296, %v412, 0.0
        %v415 = vsel %vm297, %v413, 0.0
        %416 = vst [vmem:[#allocation2 + $0x40] sm:$0xf] %v414
        %417 = vst [vmem:[#allocation2 + $0x48] sm:$0xf] %v415
        %v418 = vld [vmem:[#allocation2] sm:$0xff]
        %v419 = vld [vmem:[#allocation2 + $0x8] sm:$0xff]
        %v420 = vld [vmem:[#allocation2 + $0x10] sm:$0xff]
        %v421 = vld [vmem:[#allocation2 + $0x18] sm:$0xff]
        %v422 = vld [vmem:[#allocation2 + $0x20] sm:$0xff]
        %v423 = vld [vmem:[#allocation2 + $0x28] sm:$0xff]
        %v424 = vld [vmem:[#allocation2 + $0x30] sm:$0xff]
        %v425 = vld [vmem:[#allocation2 + $0x38] sm:$0xff]
        %v426 = vld [vmem:[#allocation2 + $0x40] sm:$0xf]
        %v427 = vld [vmem:[#allocation2 + $0x48] sm:$0xf]
        %v428 = vpack.c.bf16 %v420, %v418
        %v429 = vpack.c.bf16 %v421, %v419
        %v430 = vpack.c.bf16 %v424, %v422
        %v431 = vpack.c.bf16 %v425, %v423
        %v432 = vpack.c.bf16 %v426, %v426
        %v433 = vpack.c.bf16 %v427, %v427
        %435 = vset.pattern.permute.xlu0 0
        %436 = vperm.xlu0 %435, %v216
        %v437 = vpop.permute.xlu0 %436
        %vm439 = vcmask 293888
        %v441 = vsel %vm439, %v215, 0
        %vm443 = vcmask 1041408
        %v445 = vsel %vm443, %v432, 0
        %v448 = vsel %vm443, %v433, 0
        %450 = vmatprep.subr.bf16.mxu0 %v429
        %451 = vmatpush1.bf16.msra.mxu0 %v428
        %452 = vmatprep.subr.bf16.mxu0 %v431
        %453 = vmatpush1.bf16.msra.mxu0 %v430
        %454 = vmatprep.subr.bf16.mxu0 %v448
        %455 = vmatpush1.bf16.msra.mxu0 %v445
        %456 = vmatprep.subr.bf16.mxu0 0
        %457 = vmatpush1.bf16.msra.mxu0 0
        %458 = vmatprep.subr.bf16.mxu0 0
        %459 = vmatpush1.bf16.msra.mxu0 0
        %460 = vmatprep.subr.bf16.mxu0 0
        %461 = vmatpush1.bf16.msra.mxu0 0
        %462 = vmatprep.subr.bf16.mxu0 0
        %463 = vmatpush1.bf16.msra.mxu0 0
        %464 = vmatprep.subr.bf16.mxu0 0
        %465 = vmatpush1.bf16.msra.mxu0 0
        %466 = vmatprep.subr.bf16.mxu0 0
        %467 = vmatpush1.bf16.msra.mxu0 0
        %468 = vmatprep.subr.bf16.mxu0 0
        %469 = vmatpush1.bf16.msra.mxu0 0
        %470 = vmatprep.subr.bf16.mxu0 0
        %471 = vmatpush1.bf16.msra.mxu0 0
        %472 = vmatprep.subr.bf16.mxu0 0
        %473 = vmatpush1.bf16.msra.mxu0 0
        %474 = vmatprep.subr.bf16.mxu0 0
        %475 = vmatpush1.bf16.msra.mxu0 0
        %476 = vmatprep.subr.bf16.mxu0 0
        %477 = vmatpush1.bf16.msra.mxu0 0
        %478 = vmatprep.subr.bf16.mxu0 0
        %479 = vmatpush1.bf16.msra.mxu0 0
        %480 = vmatprep.subr.bf16.mxu0 0
        %481 = vmatpush1.bf16.msra.mxu0 0
        %482 = vmatprep.mubr.bf16.mxu0 0
        %483 = vmatmul.mubr.bf16.gmra.mrb[0].mxu0 %v441
        %v484 = vpop.f32.mrb[0].mxu0
        %v485 = vadd.f32 %v437, %v484
        %v486 = vpop.f32.mrb[0].mxu0
        %v487 = vadd.f32 %v437, %v486
        %v488 = vpop.f32.mrb[0].mxu0
        %v489 = vpop.f32.mrb[0].mxu0
        %490 = vdwg.mxu0
        %v491 = vmax.f32 %v485, 0.0
        %v492 = vmax.f32 %v487, 0.0
        %493 = vst [vmem:[%s213] sm:$0xff] %v491
        %494 = vst [vmem:[%s213 + $0x8] sm:$0xff] %v492
        %s495 = sand.u32 %s118, 1
        %s496 = scalar_lea.sflag [#allocation5], %s495
        %s497 = sand.u32 %s118, 1
        %s498 = smul.addr %s497, 16
        %s499 = scalar_lea.vmem [#allocation6], %s498
        // Predicated region
        $region41: #{tpu_custom_call.1} parent=35 // pred_check
          %p500 = pneg %p128
        $region42: #{tpu_custom_call.1} parent=35 // pred_check_branch
          %502 = sbr.rel (%p500) target = $region44
        $region43: #{tpu_custom_call.1} parent=35 // pred_region
          %s504 = ssub.s32 256, 256
          %505 = vsyncadd %s496, %s504
          %s506 = smul.addr %s21, 2
          %s507 = smul.addr %s506, 128
          %s508 = scalar_lea.hbm %s4, %s507
          %s510 = sshll.u32 %s499, 4
          %s511 = int_to_ptr.vmem [resolvable:$true] %s510
          %513 = dma.vmem_to_hbm [thread:$0]  %s511, 256, %s508, %s496
        $region44: #{tpu_custom_call.1} parent=35 // pred_fallthru
          _
      $region36: #{tpu_custom_call.1} parent=5 // pred_fallthru
        _
      %p514 = scmp.le.s32.totalorder 2, %s16
      // Predicated region
      $region45: #{tpu_custom_call.1} parent=5 // pred_check
        %p515 = pneg %p514
      $region46: #{tpu_custom_call.1} parent=5 // pred_check_branch
        %517 = sbr.rel (%p515) target = $region48
      $region47: #{tpu_custom_call.1} parent=5 // pred_region
        %s518 = ssub.s32 %s16, 2
        // Predicated region
        $region49: #{tpu_custom_call.1} parent=47 // pred_check
          %p519 = pneg %p134
        $region50: #{tpu_custom_call.1} parent=47 // pred_check_branch
          %521 = sbr.rel (%p519) target = $region52
        $region51: #{tpu_custom_call.1} parent=47 // pred_region
          %s522 = sand.u32 %s119, 1
          %s523 = scalar_lea.sflag [#allocation5], %s522
          %s524 = sand.u32 %s119, 1
          %s525 = smul.addr %s524, 16
          %s526 = scalar_lea.vmem [#allocation6], %s525
          %527 = dma.done %s523, 256
        $region52: #{tpu_custom_call.1} parent=47 // pred_fallthru
          _
      $region48: #{tpu_custom_call.1} parent=5 // pred_fallthru
        _
    $region6: #{tpu_custom_call.1} parent=1 // loop_footer
      %s20 = sadd.s32 1, %s16
    $region7: #{tpu_custom_call.1} parent=1 // loop_footer_branch
      %15 = sbr.rel target = $region3
    $region8: #{tpu_custom_call.1} parent=1 // loop_exit
      _
    %528 = vsyncpa [#allocation4], 1
    %s529 = scalar_lea.sflag [#allocation4], 1
    %530 = vsyncpa %s529, 1
    %531 = vsyncpa [#allocation5], 1
    %s532 = scalar_lea.sflag [#allocation5], 1
    %533 = vsyncpa %s532, 1

</llo_original>
